<compile_context>
chip_gen: v7x
topology: tpu7x:2x2x1
jax: 0.10.0
libtpu: 0.0.40
codegen_flags: <defaults>
</compile_context>

<pallas_src>
import functools
from typing import NamedTuple, Optional

import jax
import jax.numpy as jnp
import numpy as np
from jax.experimental import pallas as pl
from jax.experimental.pallas import tpu as pltpu


# ----------------------------------------------------------------------------
# Helpers
# ----------------------------------------------------------------------------
def _cdiv(a, b):
    return (a + b - 1) // b


def _round_up(x, m):
    return _cdiv(x, m) * m


def _fit_tile(dim, max_tile, align):
    """Tile <= ~max_tile, multiple of `align`, minimizing padding waste.

    Instead of clamping to max_tile and then padding up to a full tile (which
    can nearly double the work, e.g. dim=260 -> padded 512), pick the block
    count first and then the smallest aligned tile that covers `dim`.
    """
    dim_al = _round_up(max(dim, 1), align)
    t = min(_round_up(max(max_tile, align), align), dim_al)
    n_blocks = _cdiv(dim, t)
    return _round_up(_cdiv(dim, n_blocks), align)


def _vmem_budget_bytes():
    """Generation-aware VMEM budget (v5e/v6e: 128 MiB, v7x: 64 MiB per TC)."""
    try:
        cap = int(getattr(pltpu.get_tpu_info(), "vmem_capacity_bytes",
                          64 * 1024 * 1024))
    except Exception:
        cap = 64 * 1024 * 1024  # assume the smallest (v7x) if query fails
    return (cap * 3) // 4       # headroom for Mosaic-internal scratch


# ----------------------------------------------------------------------------
# Kernels
# ----------------------------------------------------------------------------
def _linear_kernel_1pass(x_ref, w_ref, b_ref, o_ref, *, compute_dtype):
    # Whole (padded) reduction dim is resident: one dot per output tile, bias
    # folded in directly, no accumulator scratch.
    xv = x_ref[...]
    if xv.dtype != compute_dtype:
        xv = xv.astype(compute_dtype)          # VPU cast, hidden under the MXU
    acc = jnp.dot(xv, w_ref[...], preferred_element_type=jnp.float32)
    o_ref[...] = (acc + b_ref[...]).astype(o_ref.dtype)


def _linear_kernel_kloop(x_ref, w_ref, b_ref, o_ref, acc_ref, *, compute_dtype):
    # grid = (M-blocks, N-blocks, K-blocks); K is the reduction (last, arbitrary).
    k = pl.program_id(2)
    xv = x_ref[...]
    if xv.dtype != compute_dtype:
        xv = xv.astype(compute_dtype)
    part = jnp.dot(xv, w_ref[...], preferred_element_type=jnp.float32)

    @pl.when(k == 0)
    def _():
        acc_ref[...] = part                    # write first partial: no zero-init

    @pl.when(k > 0)
    def _():
        acc_ref[...] += part

    @pl.when(k == pl.num_programs(2) - 1)
    def _():
        o_ref[...] = (acc_ref[...] + b_ref[...]).astype(o_ref.dtype)


# ----------------------------------------------------------------------------
# Planning (F/H-only plan is reusable across calls -> weights prepared once)
# ----------------------------------------------------------------------------
class _FHPlan(NamedTuple):
    tn: int
    tk: int
    Hp: int
    Fp: int
    n_blocks_n: int
    n_blocks_k: int
    use_k_axis: bool
    precast_x: bool


def _plan_fh(F, H, *, tile_m, tile_n, tile_k, out_itemsize, vmem_budget,
             k_axis: Optional[bool] = None) -> _FHPlan:
    tn = _fit_tile(H, tile_n, 128)
    Hp = _cdiv(H, tn) * tn
    n_blocks_n = Hp // tn

    # Pre-cast x to bf16 in the wrapper only when x is re-read enough times
    # (>= 3 N sweeps) to amortize the extra f32-read + bf16-write pass.
    precast_x = n_blocks_n >= 3
    x_bytes = 2 if precast_x else 4

    Fp_full = _round_up(F, 128)
    # Single-pass working set (largest tm, Pallas double-buffers in/out).
    vmem_1pass = (2 * tile_m * Fp_full * x_bytes       # x tiles
                  + 2 * Fp_full * tn * 2               # bf16 weight panel
                  + 2 * tn * 4                         # bias
                  + 2 * tile_m * tn * out_itemsize)    # output tiles
    use_k_axis = (vmem_1pass > vmem_budget) if k_axis is None else bool(k_axis)

    if use_k_axis:
        tk = _fit_tile(F, tile_k, 128)
        Fp = _cdiv(F, tk) * tk
    else:
        tk = Fp_full
        Fp = Fp_full
    return _FHPlan(tn, tk, Hp, Fp, n_blocks_n, Fp // tk, use_k_axis, precast_x)


def _prepare_params(w, b, fh: _FHPlan, compute_dtype):
    """Cast + pad weights/bias once (hoist out of the per-call path)."""
    F, H = w.shape
    wc = w.astype(compute_dtype)
    if (fh.Fp, fh.Hp) != (F, H):
        wc = jnp.pad(wc, ((0, fh.Fp - F), (0, fh.Hp - H)))
    bc = b.astype(jnp.float32)
    if fh.Hp != H:
        bc = jnp.pad(bc, (0, fh.Hp - H))
    return wc, bc.reshape(1, fh.Hp)


def _plan_m(M, fh: _FHPlan, tile_m):
    tm = _fit_tile(M, tile_m, 8)
    n_blocks_m = _cdiv(M, tm)
    # v7x shards 'parallel' grid axes across its 2 TensorCores: make sure the
    # parallel part of the grid has >= 2 blocks so both cores get work.
    if n_blocks_m * fh.n_blocks_n == 1 and M > 8:
        tm = _round_up(_cdiv(M, 2), 8)
        n_blocks_m = 2
    return tm, n_blocks_m * tm, n_blocks_m


# ----------------------------------------------------------------------------
# pallas_call wrapper
# ----------------------------------------------------------------------------
def _linear_pallas_core(x2d, wc, b2d, H, fh: _FHPlan, *, tile_m, compute_dtype,
                        out_dtype, vmem_budget):
    M, F = x2d.shape
    tm, Mp, n_m = _plan_m(M, fh, tile_m)

    xc = x2d.astype(compute_dtype) if fh.precast_x else x2d
    if (Mp, fh.Fp) != (M, F):
        xc = jnp.pad(xc, ((0, Mp - M), (0, fh.Fp - F)))

    out_itemsize = jnp.dtype(out_dtype).itemsize
    cost = pl.CostEstimate(
        flops=2 * Mp * fh.Fp * fh.Hp,
        transcendentals=0,
        bytes_accessed=(xc.size * xc.dtype.itemsize
                        + wc.size * wc.dtype.itemsize
                        + b2d.size * b2d.dtype.itemsize
                        + Mp * fh.Hp * out_itemsize),
    )

    if not fh.use_k_axis:
        # Grid (N outer, M inner): weight panel block index is constant across
        # the inner M sweep -> DMA'd once per N block.
        grid = (fh.n_blocks_n, n_m)
        yp = pl.pallas_call(
            functools.partial(_linear_kernel_1pass, compute_dtype=compute_dtype),
            out_shape=jax.ShapeDtypeStruct((Mp, fh.Hp), out_dtype),
            grid_spec=pltpu.PrefetchScalarGridSpec(
                num_scalar_prefetch=0,
                grid=grid,
                in_specs=[
                    pl.BlockSpec((tm, fh.Fp), lambda j, i: (i, 0)),      # x
                    pl.BlockSpec((fh.Fp, fh.tn), lambda j, i: (0, j)),   # w
                    pl.BlockSpec((1, fh.tn), lambda j, i: (0, j)),       # bias
                ],
                out_specs=pl.BlockSpec((tm, fh.tn), lambda j, i: (i, j)),
            ),
            compiler_params=pltpu.CompilerParams(
                dimension_semantics=("parallel", "parallel"),
                vmem_limit_bytes=int(vmem_budget),
            ),
            cost_estimate=cost,
        )(xc, wc, b2d)
    else:
        grid = (n_m, fh.n_blocks_n, fh.n_blocks_k)
        yp = pl.pallas_call(
            functools.partial(_linear_kernel_kloop, compute_dtype=compute_dtype),
            out_shape=jax.ShapeDtypeStruct((Mp, fh.Hp), out_dtype),
            grid_spec=pltpu.PrefetchScalarGridSpec(
                num_scalar_prefetch=0,
                grid=grid,
                in_specs=[
                    pl.BlockSpec((tm, fh.tk), lambda i, j, k: (i, k)),     # x
                    pl.BlockSpec((fh.tk, fh.tn), lambda i, j, k: (k, j)),  # w
                    pl.BlockSpec((1, fh.tn), lambda i, j, k: (0, j)),      # bias
                ],
                out_specs=pl.BlockSpec((tm, fh.tn), lambda i, j, k: (i, j)),
                scratch_shapes=[pltpu.VMEM((tm, fh.tn), jnp.float32)],     # f32 acc
            ),
            compiler_params=pltpu.CompilerParams(
                dimension_semantics=("parallel", "parallel", "arbitrary"),
                vmem_limit_bytes=int(vmem_budget),
            ),
            cost_estimate=cost,
        )(xc, wc, b2d)

    if (Mp, fh.Hp) != (M, H):
        yp = yp[:M, :H]
    return yp


def linear_pallas(x2d, w, b, *, tile_m=512, tile_n=1024, tile_k=512,
                  compute_dtype=jnp.bfloat16, out_dtype=None, k_axis=None,
                  force_pallas=False, small_problem_flops=1 << 18):
    """y = x2d @ w + b with x2d: (M, F), w: (F, H), b: (H,). Any M/F/H."""
    M, F = x2d.shape
    Fw, H = w.shape
    assert F == Fw, "weight/in_features mismatch"
    out_dtype = jnp.dtype(out_dtype if out_dtype is not None else x2d.dtype)

    # Tiny-problem fast path: pallas_call / pad / cast overhead dominates.
    if not force_pallas and 2 * M * F * H <= small_problem_flops:
        y = jnp.dot(x2d.astype(compute_dtype), w.astype(compute_dtype),
                    preferred_element_type=jnp.float32) + b.astype(jnp.float32)
        return y.astype(out_dtype)

    vmem_budget = _vmem_budget_bytes()
    fh = _plan_fh(F, H, tile_m=tile_m, tile_n=tile_n, tile_k=tile_k,
                  out_itemsize=out_dtype.itemsize, vmem_budget=vmem_budget,
                  k_axis=k_axis)
    wc, b2d = _prepare_params(w, b, fh, compute_dtype)
    return _linear_pallas_core(x2d, wc, b2d, H, fh, tile_m=tile_m,
                               compute_dtype=compute_dtype, out_dtype=out_dtype,
                               vmem_budget=vmem_budget)


# ----------------------------------------------------------------------------
# TimeDistributed forward (PyTorch semantics)
# ----------------------------------------------------------------------------
# TODO(synk): TimeDistributed can wrap any nn.Module; only the canonical
# nn.Linear wrapped-module is implemented as a Pallas kernel.
def time_distributed_linear(x, w, b, *, batch_first=True, **kwargs):
    """TimeDistributed(Linear(F, H)) forward pass (PyTorch semantics)."""
    if x.ndim <= 2:
        x2d = x if x.ndim == 2 else x.reshape(1, -1)
        y = linear_pallas(x2d, w, b, **kwargs)
        return y if x.ndim == 2 else y.reshape(-1)

    # x_reshape = x.contiguous().view(-1, x.size(-1))
    x2d = x.reshape(-1, x.shape[-1])
    y = linear_pallas(x2d, w, b, **kwargs)

    if batch_first:
        return y.reshape(x.shape[0], -1, y.shape[-1])
    return y.reshape(-1, x.shape[1], y.shape[-1])


def make_time_distributed_linear(w, b, *, batch_first=True, tile_m=512,
                                 tile_n=1024, tile_k=512,
                                 compute_dtype=jnp.bfloat16,
                                 out_dtype=jnp.float32, k_axis=None):
    """Weight-cached variant: cast/pad the parameters once, reuse per call."""
    F, H = w.shape
    out_dtype = jnp.dtype(out_dtype)
    vmem_budget = _vmem_budget_bytes()
    fh = _plan_fh(F, H, tile_m=tile_m, tile_n=tile_n, tile_k=tile_k,
                  out_itemsize=out_dtype.itemsize, vmem_budget=vmem_budget,
                  k_axis=k_axis)
    wc, b2d = _prepare_params(w, b, fh, compute_dtype)

    def _apply2d(x2d):
        return _linear_pallas_core(x2d, wc, b2d, H, fh, tile_m=tile_m,
                                   compute_dtype=compute_dtype,
                                   out_dtype=out_dtype, vmem_budget=vmem_budget)

    def apply(x):
        if x.ndim <= 2:
            x2d = x if x.ndim == 2 else x.reshape(1, -1)
            y = _apply2d(x2d)
            return y if x.ndim == 2 else y.reshape(-1)
        y = _apply2d(x.reshape(-1, x.shape[-1]))
        if batch_first:
            return y.reshape(x.shape[0], -1, H)
        return y.reshape(-1, x.shape[1], H)

    return apply


# ----------------------------------------------------------------------------
# Reference (same bf16-input / f32-accumulate numerics) and tests
# ----------------------------------------------------------------------------
def _reference(x, w, b, batch_first=True):
    F = x.shape[-1]
    xb = x.reshape(-1, F).astype(jnp.bfloat16)
    y = jnp.dot(xb, w.astype(jnp.bfloat16),
                preferred_element_type=jnp.float32) + b.astype(jnp.float32)
    if x.ndim <= 2:
        return y if x.ndim == 2 else y.reshape(-1)
    if batch_first:
        return y.reshape(x.shape[0], -1, w.shape[1])
    return y.reshape(-1, x.shape[1], w.shape[1])


if __name__ == "__main__":
    key = jax.random.PRNGKey(0)
    keys = jax.random.split(key, 12)

    # 1) Small canonical shape (B, T, F) -> (B, T, H); tiny-problem fast path.
    B, T, F, H = 2, 8, 32, 64
    x = jax.random.normal(keys[0], (B, T, F), dtype=jnp.float32)
    w = jax.random.normal(keys[1], (F, H), dtype=jnp.float32) / np.sqrt(F)
    b = jax.random.normal(keys[2], (H,), dtype=jnp.float32) * 0.01
    y = jax.block_until_ready(time_distributed_linear(x, w, b, batch_first=True))
    assert y.shape == (B, T, H)
    np.testing.assert_allclose(np.asarray(y), np.asarray(_reference(x, w, b)),
                               rtol=1e-3, atol=1e-3)

    # 1b) Same tiny shape, forced through the Pallas path (padding + 2-way M
    #     split across parallel grid blocks).
    yb = jax.block_until_ready(
        time_distributed_linear(x, w, b, batch_first=True, force_pallas=True))
    np.testing.assert_allclose(np.asarray(yb), np.asarray(_reference(x, w, b)),
                               rtol=1e-3, atol=1e-3)

    # 2) Non-aligned shapes, single-pass (resident-K) variant, cached weights.
    B2, T2, F2, H2 = 4, 48, 384, 320
    x2 = jax.random.normal(keys[3], (B2, T2, F2), dtype=jnp.float32)
    w2 = jax.random.normal(keys[4], (F2, H2), dtype=jnp.float32) / np.sqrt(F2)
    b2 = jax.random.normal(keys[5], (H2,), dtype=jnp.float32) * 0.01
    td2 = make_time_distributed_linear(w2, b2, batch_first=True)
    y2 = jax.block_until_ready(td2(x2))
    assert y2.shape == (B2, T2, H2)
    np.testing.assert_allclose(np.asarray(y2), np.asarray(_reference(x2, w2, b2)),
                               rtol=2e-3, atol=2e-3)

    # 3) K-grid-axis variant (f32 accumulator, pl.when init/finalize) and the
    #    batch_first=False branch; small tile_k only to exercise K accumulation.
    B3, T3, F3, H3 = 3, 20, 300, 200
    x3 = jax.random.normal(keys[6], (B3, T3, F3), dtype=jnp.float32)
    w3 = jax.random.normal(keys[7], (F3, H3), dtype=jnp.float32) / np.sqrt(F3)
    b3 = jax.random.normal(keys[8], (H3,), dtype=jnp.float32) * 0.01
    y3 = time_distributed_linear(x3, w3, b3, batch_first=False,
                                 k_axis=True, tile_k=128)
    y3 = jax.block_until_ready(y3)
    assert y3.shape == (B3, T3, H3)
    np.testing.assert_allclose(
        np.asarray(y3), np.asarray(_reference(x3, w3, b3, batch_first=False)),
        rtol=2e-3, atol=2e-3)

    # 4) Multi-N-block path (x pre-cast to bf16 when Hp/tn >= 3).
    B4, T4, F4, H4 = 2, 16, 128, 384
    x4 = jax.random.normal(keys[9], (B4, T4, F4), dtype=jnp.float32)
    w4 = jax.random.normal(keys[10], (F4, H4), dtype=jnp.float32) / np.sqrt(F4)
    b4 = jax.random.normal(keys[11], (H4,), dtype=jnp.float32) * 0.01
    y4 = time_distributed_linear(x4, w4, b4, batch_first=True,
                                 tile_n=128, force_pallas=True)
    y4 = jax.block_until_ready(y4)
    assert y4.shape == (B4, T4, H4)
    np.testing.assert_allclose(np.asarray(y4), np.asarray(_reference(x4, w4, b4)),
                               rtol=2e-3, atol=2e-3)

    # 5) 2-D input: module applied directly (x.ndim <= 2 branch).
    x5 = jax.random.normal(keys[0], (24, F), dtype=jnp.float32)
    y5 = jax.block_until_ready(time_distributed_linear(x5, w, b))
    assert y5.shape == (24, H)
    np.testing.assert_allclose(np.asarray(y5), np.asarray(_reference(x5, w, b)),
                               rtol=1e-3, atol=1e-3)

    print("KERNEL_OK")
</pallas_src>

<mosaic_0001>
module attributes {stable_mosaic.version = 11 : i64} {
  func.func @_linear_kernel_1pass(%arg0: i32, %arg1: i32, %arg2: memref<8x128xf32, #tpu.memory_space<vmem>>, %arg3: memref<128x128xbf16, #tpu.memory_space<vmem>>, %arg4: memref<1x128xf32, #tpu.memory_space<vmem>>, %arg5: memref<8x128xf32, #tpu.memory_space<vmem>>) attributes {dimension_semantics = [#tpu.dimension_semantics<parallel>, #tpu.dimension_semantics<parallel>], iteration_bounds = array<i64: 1, 2>, scalar_prefetch = 0 : i64, scratch_operands = 0 : i64, tpu.core_type = #tpu.core_type<tc>, window_params = [{transform_indices = @transform_0, window_bounds = array<i64: 8, 128>}, {transform_indices = @transform_1, window_bounds = array<i64: 128, 128>}, {transform_indices = @transform_2, window_bounds = array<i64: 1, 128>}, {transform_indices = @transform_3, window_bounds = array<i64: 8, 128>}]} {
    %c0 = arith.constant 0 : index
    %c0_0 = arith.constant 0 : index
    %0 = vector.load %arg2[%c0, %c0_0] : memref<8x128xf32, #tpu.memory_space<vmem>>, vector<8x128xf32>
    %1 = arith.truncf %0 : vector<8x128xf32> to vector<8x128xbf16>
    %c0_1 = arith.constant 0 : index
    %c0_2 = arith.constant 0 : index
    %2 = vector.load %arg3[%c0_1, %c0_2] : memref<128x128xbf16, #tpu.memory_space<vmem>>, vector<128x128xbf16>
    %cst = arith.constant dense<0.000000e+00> : vector<8x128xf32>
    %3 = tpu.matmul %1, %2, %cst {dimension_numbers = #tpu.dot_dimension_numbers<[1], [0], [0], [1], [0, 0, 1, 1], [], []>} : vector<8x128xbf16>, vector<128x128xbf16>, vector<8x128xf32> -> vector<8x128xf32>
    %c0_3 = arith.constant 0 : index
    %c0_4 = arith.constant 0 : index
    %4 = vector.load %arg4[%c0_3, %c0_4] : memref<1x128xf32, #tpu.memory_space<vmem>>, vector<1x128xf32>
    %5 = vector.broadcast %4 : vector<1x128xf32> to vector<8x128xf32>
    %6 = arith.addf %3, %5 : vector<8x128xf32>
    %c0_5 = arith.constant 0 : index
    %c0_6 = arith.constant 0 : index
    %7 = vector.load %arg5[%c0_5, %c0_6] : memref<8x128xf32, #tpu.memory_space<vmem>>, vector<8x128xf32>
    tpu.vector_store %arg5[%c0_5, %c0_6], %6 {strides = array<i32>} : memref<8x128xf32, #tpu.memory_space<vmem>>, vector<8x128xf32>,
    return
  }
  func.func @transform_0(%arg0: i32, %arg1: i32) -> (i32, i32) {
    %c0_i32 = arith.constant 0 : i32
    %c0_i32_0 = arith.constant 0 : i32
    return %arg1, %c0_i32 : i32, i32
  }
  func.func @transform_1(%arg0: i32, %arg1: i32) -> (i32, i32) {
    %c0_i32 = arith.constant 0 : i32
    %c0_i32_0 = arith.constant 0 : i32
    return %c0_i32, %arg0 : i32, i32
  }
  func.func @transform_2(%arg0: i32, %arg1: i32) -> (i32, i32) {
    %c0_i32 = arith.constant 0 : i32
    %c0_i32_0 = arith.constant 0 : i32
    return %c0_i32, %arg0 : i32, i32
  }
  func.func @transform_3(%arg0: i32, %arg1: i32) -> (i32, i32) {
    %c0_i32 = arith.constant 0 : i32
    return %arg1, %arg0 : i32, i32
  }
}

</mosaic_0001>

<llo_original>
// kernel: tpu_custom_call.1
$region0: #{tpu_custom_call.1}
  #allocation0 [shape = 'u32[]', space=smem, size = 0x4, offset = 0x4, fixed_abs, tag = 'smem constant byte address 0x4 - core index']
  #allocation1 [shape = 'u32[144,128]{1,0:T(1,128)}', space=vmem, size = 0x12000, scoped, tag = 'internal scratch']
  %s0 = inlined_call_operand.hbm [shape: f32[16,128], index: 0, kind: input, shape index: {}]
  %s1 = inlined_call_operand.hbm [shape: bf16[128,128], index: 1, kind: input, shape index: {}]
  %s2 = inlined_call_operand.vmem [shape: f32[1,128], index: 2, kind: input, shape index: {}]
  %s3 = inlined_call_operand.hbm [shape: f32[16,128], index: 3, kind: output, shape index: {}]
  %s4 = sld [smem:[#allocation0]]
  $region53: #{tpu_custom_call.1} parent=0
    _
  %s6 = ssub.s32 1, %s4
  %s7 = scalar_select 0, %s6, %s4
  $region1: #{tpu_custom_call.1} parent=0
    #allocation2 [shape = 'u8[8192]{0}', space=vmem, size = 0x2000, scoped, tag = 'input window, operand 0']
    #allocation3 [shape = 's32[2]{0}', space=sflag, size = 0x8, scoped, tag = 'scoped memory for tpu_custom_call.1']
    #allocation4 [shape = 's32[2]{0}', space=sflag, size = 0x8, scoped, tag = 'scoped memory for tpu_custom_call.1']
    #allocation5 [shape = 'u8[32768]{0}', space=vmem, size = 0x8000, scoped, tag = 'input window, operand 1, single buffered']
    #allocation6 [shape = 's32[1]{0}', space=sflag, size = 0x4, scoped, tag = 'scoped memory for tpu_custom_call.1']
    #allocation7 [shape = 'u8[8192]{0}', space=vmem, size = 0x2000, scoped, tag = 'output window, operand 0']
    %8 = vsyncpa [#allocation3], 0
    %s9 = scalar_lea.sflag [#allocation3], 1
    %10 = vsyncpa %s9, 0
    %11 = vsyncpa [#allocation6], 0
    %12 = vsyncpa [#allocation4], 0
    %s13 = scalar_lea.sflag [#allocation4], 1
    %14 = vsyncpa %s13, 0
    loop: start=0, step=1, limit=4
    $region2: #{tpu_custom_call.1} parent=1 // loop_pre_header
      _
    $region3: #{tpu_custom_call.1} parent=1 // loop_header
      %s16 = sphi 0, %s20
      %p17 = scmp.ge.s32.totalorder %s16, 4
      %s23 = sphi 0, %s35
      %s24 = sphi 0, %s31
      %s25 = sphi 0, %s23
      %s26 = sphi 0, %s24
      %s27 = sphi 0, %s25
      %s28 = sphi 0, %s26
      %s38 = sphi 0, %s40
      %s41 = sphi 0, %s38
      %s42 = sphi 0, %s41
      %s58 = sphi 0, %s42
      %s64 = sphi 0, %s66
      %s67 = sphi 0, %s64
      %s68 = sphi 0, %s67
      %s84 = sphi 0, %s68
      %s90 = sphi 0, %s92
      %s93 = sphi 0, %s90
      %s94 = sphi 0, %s93
      %s110 = sphi 0, %s94
      %s118 = sphi 0, %s120
      %s121 = sphi 0, %s118
      %s122 = sphi 0, %s121
      %s138 = sphi 0, %s122
    $region4: #{tpu_custom_call.1} parent=1 // loop_header_branch
      %19 = sbr.rel (%p17) target = $region8
    $region5: #{tpu_custom_call.1} parent=1 // loop_body
      %s21 = ssub.s32 %s16, 1
      %s22 = ssub.s32 %s16, 2
      %s29 = sadd.s32 1, %s24
      %p30 = scmp.ge.s32.totalorder %s29, 2
      %s31 = scalar_select %p30, 0, %s29
      %s32 = sadd.s32 1, %s23
      %s33 = scalar_select %p30, %s32, %s23
      %p34 = scmp.ge.s32.totalorder %s33, 1
      %s35 = scalar_select %p34, 0, %s33
      %s36 = ssub.s32 %s24, %s31
      %p37 = scmp.eq.s32.totalorder %s36, 0
      %s39 = sadd.s32 %s38, 1
      %s40 = scalar_select %p37, %s38, %s39
      %p43 = pneg %p37
      %p44 = scmp.eq.s32.totalorder %s16, 1
      %p45 = por %p43, %p44
      %p46 = scmp.ne.s32.totalorder %s38, %s41
      %p47 = scmp.eq.s32.totalorder %s16, 0
      %p48 = por %p46, %p47
      %p49 = scmp.ne.s32.totalorder %s38, %s41
      %p50 = scmp.eq.s32.totalorder %s21, 1
      %p51 = por %p49, %p50
      %p52 = scmp.ne.s32.totalorder %s41, %s42
      %p53 = scmp.eq.s32.totalorder %s21, 0
      %p54 = por %p52, %p53
      %p55 = scmp.ne.s32.totalorder %s41, %s42
      %p56 = scmp.eq.s32.totalorder %s22, 1
      %p57 = por %p55, %p56
      %p59 = scmp.ne.s32.totalorder %s42, %s58
      %p60 = scmp.eq.s32.totalorder %s22, 0
      %p61 = por %p59, %p60
      %s62 = ssub.s32 %s23, %s35
      %p63 = scmp.eq.s32.totalorder %s62, 0
      %s65 = sadd.s32 %s64, 1
      %s66 = scalar_select %p63, %s64, %s65
      %p69 = pneg %p63
      %p70 = scmp.eq.s32.totalorder %s16, 1
      %p71 = por %p69, %p70
      %p72 = scmp.ne.s32.totalorder %s64, %s67
      %p73 = scmp.eq.s32.totalorder %s16, 0
      %p74 = por %p72, %p73
      %p75 = scmp.ne.s32.totalorder %s64, %s67
      %p76 = scmp.eq.s32.totalorder %s21, 1
      %p77 = por %p75, %p76
      %p78 = scmp.ne.s32.totalorder %s67, %s68
      %p79 = scmp.eq.s32.totalorder %s21, 0
      %p80 = por %p78, %p79
      %p81 = scmp.ne.s32.totalorder %s67, %s68
      %p82 = scmp.eq.s32.totalorder %s22, 1
      %p83 = por %p81, %p82
      %p85 = scmp.ne.s32.totalorder %s68, %s84
      %p86 = scmp.eq.s32.totalorder %s22, 0
      %p87 = por %p85, %p86
      %s88 = ssub.s32 %s23, %s35
      %p89 = scmp.eq.s32.totalorder %s88, 0
      %s91 = sadd.s32 %s90, 1
      %s92 = scalar_select %p89, %s90, %s91
      %p95 = pneg %p89
      %p96 = scmp.eq.s32.totalorder %s16, 1
      %p97 = por %p95, %p96
      %p98 = scmp.ne.s32.totalorder %s90, %s93
      %p99 = scmp.eq.s32.totalorder %s16, 0
      %p100 = por %p98, %p99
      %p101 = scmp.ne.s32.totalorder %s90, %s93
      %p102 = scmp.eq.s32.totalorder %s21, 1
      %p103 = por %p101, %p102
      %p104 = scmp.ne.s32.totalorder %s93, %s94
      %p105 = scmp.eq.s32.totalorder %s21, 0
      %p106 = por %p104, %p105
      %p107 = scmp.ne.s32.totalorder %s93, %s94
      %p108 = scmp.eq.s32.totalorder %s22, 1
      %p109 = por %p107, %p108
      %p111 = scmp.ne.s32.totalorder %s94, %s110
      %p112 = scmp.eq.s32.totalorder %s22, 0
      %p113 = por %p111, %p112
      %s114 = ssub.s32 %s24, %s31
      %s115 = ssub.s32 %s23, %s35
      %s116 = sor.u32 %s114, %s115
      %p117 = scmp.eq.s32.totalorder %s116, 0
      %s119 = sadd.s32 %s118, 1
      %s120 = scalar_select %p117, %s118, %s119
      %p123 = pneg %p117
      %p124 = scmp.eq.s32.totalorder %s16, 1
      %p125 = por %p123, %p124
      %p126 = scmp.ne.s32.totalorder %s118, %s121
      %p127 = scmp.eq.s32.totalorder %s16, 0
      %p128 = por %p126, %p127
      %p129 = scmp.ne.s32.totalorder %s118, %s121
      %p130 = scmp.eq.s32.totalorder %s21, 1
      %p131 = por %p129, %p130
      %p132 = scmp.ne.s32.totalorder %s121, %s122
      %p133 = scmp.eq.s32.totalorder %s21, 0
      %p134 = por %p132, %p133
      %p135 = scmp.ne.s32.totalorder %s121, %s122
      %p136 = scmp.eq.s32.totalorder %s22, 1
      %p137 = por %p135, %p136
      %p139 = scmp.ne.s32.totalorder %s122, %s138
      %p140 = scmp.eq.s32.totalorder %s22, 0
      %p141 = por %p139, %p140
      %p142 = scmp.le.s32.totalorder 1, %s16
      %p143 = scmp.lt.s32.totalorder %s16, 3
      %p144 = pnand %p142, %p143
      %p145 = pneg %p144
      // Predicated region
      $region9: #{tpu_custom_call.1} parent=5 // pred_check
        _
      $region10: #{tpu_custom_call.1} parent=5 // pred_check_branch
        %147 = sbr.rel (%p144) target = $region12
      $region11: #{tpu_custom_call.1} parent=5 // pred_region
        %s148 = ssub.s32 %s16, 1
        // Predicated region
        $region13: #{tpu_custom_call.1} parent=11 // pred_check
          %p149 = pneg %p80
        $region14: #{tpu_custom_call.1} parent=11 // pred_check_branch
          %151 = sbr.rel (%p149) target = $region16
        $region15: #{tpu_custom_call.1} parent=11 // pred_region
          %s153 = ssub.s32 1024, 1024
          %154 = vsyncadd [#allocation6], %s153
          %s155 = smul.addr %s25, 64
          %s156 = scalar_lea.hbm %s1, %s155
          %s157 = sshll.u32 [#allocation5], 4
          %s158 = int_to_ptr.vmem [resolvable:$true] %s157
          %163 = dma.hbm_to_vmem [thread:$0]  %s156, 1024, %s158, [#allocation6], 64, 64, 4
        $region16: #{tpu_custom_call.1} parent=11 // pred_fallthru
          _
        // Predicated region
        $region17: #{tpu_custom_call.1} parent=11 // pred_check
          %p164 = pneg %p106
        $region18: #{tpu_custom_call.1} parent=11 // pred_check_branch
          %166 = sbr.rel (%p164) target = $region20
        $region19: #{tpu_custom_call.1} parent=11 // pred_region
          %p167 = scmp.lt.s32.totalorder %s25, 0
          %s168 = scalar_select %p167, %s25, 0
          %s169 = scalar_lea.vmem %s2, %s168
        $region20: #{tpu_custom_call.1} parent=11 // pred_fallthru
          _
      $region12: #{tpu_custom_call.1} parent=5 // pred_fallthru
        _
      %p170 = scmp.lt.s32.totalorder %s16, 2
      // Predicated region
      $region21: #{tpu_custom_call.1} parent=5 // pred_check
        %p171 = pneg %p170
      $region22: #{tpu_custom_call.1} parent=5 // pred_check_branch
        %173 = sbr.rel (%p171) target = $region24
      $region23: #{tpu_custom_call.1} parent=5 // pred_region
        // Predicated region
        $region25: #{tpu_custom_call.1} parent=23 // pred_check
          %p174 = pneg %p48
        $region26: #{tpu_custom_call.1} parent=23 // pred_check_branch
          %176 = sbr.rel (%p174) target = $region28
        $region27: #{tpu_custom_call.1} parent=23 // pred_region
          %s177 = sand.u32 %s38, 1
          %s178 = scalar_lea.sflag [#allocation3], %s177
          %s179 = sand.u32 %s38, 1
          %s180 = smul.addr %s179, 8
          %s181 = scalar_lea.vmem [#allocation2], %s180
          %s183 = ssub.s32 128, 128
          %184 = vsyncadd %s178, %s183
          %s185 = smul.addr %s24, 128
          %s186 = scalar_lea.hbm %s0, %s185
          %s188 = sshll.u32 %s181, 4
          %s189 = int_to_ptr.vmem [resolvable:$true] %s188
          %191 = dma.hbm_to_vmem [thread:$0]  %s186, 128, %s189, %s178
        $region28: #{tpu_custom_call.1} parent=23 // pred_fallthru
          _
      $region24: #{tpu_custom_call.1} parent=5 // pred_fallthru
        _
      %p192 = scmp.le.s32.totalorder 1, %s16
      %p193 = scmp.lt.s32.totalorder %s16, 3
      %p194 = pnand %p192, %p193
      %p195 = pneg %p194
      // Predicated region
      $region29: #{tpu_custom_call.1} parent=5 // pred_check
        _
      $region30: #{tpu_custom_call.1} parent=5 // pred_check_branch
        %197 = sbr.rel (%p194) target = $region32
      $region31: #{tpu_custom_call.1} parent=5 // pred_region
        %s198 = ssub.s32 %s16, 1
        %s199 = sand.u32 %s41, 1
        %s200 = scalar_lea.sflag [#allocation3], %s199
        %s201 = sand.u32 %s41, 1
        %s202 = smul.addr %s201, 8
        %s203 = scalar_lea.vmem [#allocation2], %s202
        // Predicated region
        $region33: #{tpu_custom_call.1} parent=31 // pred_check
          %p204 = pneg %p54
        $region34: #{tpu_custom_call.1} parent=31 // pred_check_branch
          %206 = sbr.rel (%p204) target = $region36
        $region35: #{tpu_custom_call.1} parent=31 // pred_region
          %207 = dma.done %s200, 128
        $region36: #{tpu_custom_call.1} parent=31 // pred_fallthru
          _
        // Predicated region
        $region37: #{tpu_custom_call.1} parent=31 // pred_check
          %p208 = pneg %p80
        $region38: #{tpu_custom_call.1} parent=31 // pred_check_branch
          %210 = sbr.rel (%p208) target = $region40
        $region39: #{tpu_custom_call.1} parent=31 // pred_region
          %211 = dma.done [#allocation6], 1024
        $region40: #{tpu_custom_call.1} parent=31 // pred_fallthru
          _
        %s212 = sand.u32 %s41, 1
        %s213 = scalar_lea.sflag [#allocation3], %s212
        %s214 = sand.u32 %s41, 1
        %s215 = smul.addr %s214, 8
        %s216 = scalar_lea.vmem [#allocation2], %s215
        %p217 = pneg %p54
        %p218 = pneg %p51
        %p219 = pneg %p80
        %p220 = pneg %p77
        %p221 = scmp.lt.s32.totalorder %s25, 0
        %s222 = scalar_select %p221, %s25, 0
        %s223 = scalar_lea.vmem %s2, %s222
        %p224 = pneg %p106
        %p225 = pneg %p103
        %p226 = pneg %p134
        %p227 = pneg %p131
        %s228 = sand.u32 %s121, 1
        %s229 = scalar_lea.sflag [#allocation4], %s228
        %s230 = sand.u32 %s121, 1
        %s231 = smul.addr %s230, 8
        %s232 = scalar_lea.vmem [#allocation7], %s231
        %p233 = scmp.lt.s32.totalorder %s25, 0
        %s234 = scalar_select %p233, %s25, 0
        %s235 = scalar_lea.vmem %s2, %s234
        %v237 = vld [vmem:[%s203] sm:$0xff]
        %v238 = vpack.c.bf16 %v237, %v237
        %v239 = vld [vmem:[#allocation5] sm:$0xf]
        %v240 = vld [vmem:[#allocation5 + $0x4] sm:$0xf]
        %v241 = vld [vmem:[#allocation5 + $0x8] sm:$0xf]
        %v242 = vld [vmem:[#allocation5 + $0xc] sm:$0xf]
        %v243 = vld [vmem:[#allocation5 + $0x10] sm:$0xf]
        %v244 = vld [vmem:[#allocation5 + $0x14] sm:$0xf]
        %v245 = vld [vmem:[#allocation5 + $0x18] sm:$0xf]
        %v246 = vld [vmem:[#allocation5 + $0x1c] sm:$0xf]
        %v247 = vld [vmem:[#allocation5 + $0x20] sm:$0xf]
        %v248 = vld [vmem:[#allocation5 + $0x24] sm:$0xf]
        %v249 = vld [vmem:[#allocation5 + $0x28] sm:$0xf]
        %v250 = vld [vmem:[#allocation5 + $0x2c] sm:$0xf]
        %v251 = vld [vmem:[#allocation5 + $0x30] sm:$0xf]
        %v252 = vld [vmem:[#allocation5 + $0x34] sm:$0xf]
        %v253 = vld [vmem:[#allocation5 + $0x38] sm:$0xf]
        %v254 = vld [vmem:[#allocation5 + $0x3c] sm:$0xf]
        %v255 = vld [vmem:[%s235] sm:$0x1]
        %v257 = vlaneseq
        %v258 = vshrl.u32 %v257, 7
        %v259 = vsub.s32 0, %v258
        %v260 = vrot.slane %v255, %v259
        %v278 = vunpack.c.l.b16 %v239
        %v279 = vunpack.c.l.b16 %v240
        %v280 = vunpack.c.l.b16 %v241
        %v281 = vunpack.c.l.b16 %v242
        %v282 = vunpack.c.l.b16 %v243
        %v283 = vunpack.c.l.b16 %v244
        %v284 = vunpack.c.l.b16 %v245
        %v285 = vunpack.c.l.b16 %v246
        %v286 = vunpack.c.l.b16 %v247
        %v287 = vunpack.c.l.b16 %v248
        %v288 = vunpack.c.l.b16 %v249
        %v289 = vunpack.c.l.b16 %v250
        %v290 = vunpack.c.l.b16 %v251
        %v291 = vunpack.c.l.b16 %v252
        %v292 = vunpack.c.l.b16 %v253
        %v293 = vunpack.c.l.b16 %v254
        %v294 = vpack.c.b16 %v279, %v278
        %v295 = vpack.c.b16 %v281, %v280
        %v296 = vpack.c.b16 %v283, %v282
        %v297 = vpack.c.b16 %v285, %v284
        %v298 = vpack.c.b16 %v287, %v286
        %v299 = vpack.c.b16 %v289, %v288
        %v300 = vpack.c.b16 %v291, %v290
        %v301 = vpack.c.b16 %v293, %v292
        %310 = vmatprep.subr.bf16.mxu0 0
        %311 = vmatpush1.bf16.msra.mxu0 %v294
        %312 = vmatprep.subr.bf16.mxu0 0
        %313 = vmatpush1.bf16.msra.mxu0 %v295
        %314 = vmatprep.subr.bf16.mxu0 0
        %315 = vmatpush1.bf16.msra.mxu0 %v296
        %316 = vmatprep.subr.bf16.mxu0 0
        %317 = vmatpush1.bf16.msra.mxu0 %v297
        %318 = vmatprep.subr.bf16.mxu0 0
        %319 = vmatpush1.bf16.msra.mxu0 %v298
        %320 = vmatprep.subr.bf16.mxu0 0
        %321 = vmatpush1.bf16.msra.mxu0 %v299
        %322 = vmatprep.subr.bf16.mxu0 0
        %323 = vmatpush1.bf16.msra.mxu0 %v300
        %324 = vmatprep.subr.bf16.mxu0 0
        %325 = vmatpush1.bf16.msra.mxu0 %v301
        %326 = vmatprep.subr.bf16.mxu0 0
        %327 = vmatpush1.bf16.msra.mxu0 0
        %328 = vmatprep.subr.bf16.mxu0 0
        %329 = vmatpush1.bf16.msra.mxu0 0
        %330 = vmatprep.subr.bf16.mxu0 0
        %331 = vmatpush1.bf16.msra.mxu0 0
        %332 = vmatprep.subr.bf16.mxu0 0
        %333 = vmatpush1.bf16.msra.mxu0 0
        %334 = vmatprep.subr.bf16.mxu0 0
        %335 = vmatpush1.bf16.msra.mxu0 0
        %336 = vmatprep.subr.bf16.mxu0 0
        %337 = vmatpush1.bf16.msra.mxu0 0
        %338 = vmatprep.subr.bf16.mxu0 0
        %339 = vmatpush1.bf16.msra.mxu0 0
        %340 = vmatprep.subr.bf16.mxu0 0
        %341 = vmatpush1.bf16.msra.mxu0 0
        %342 = vmatprep.mubr.bf16.mxu0 0
        %343 = vmatmul.mubr.bf16.gmra.mrb[0].mxu0 %v238
        %v344 = vpop.f32.mrb[0].mxu0
        %v345 = vadd.f32 %v260, %v344
        %v346 = vpop.f32.mrb[0].mxu0
        %v347 = vpop.f32.mrb[0].mxu0
        %v348 = vpop.f32.mrb[0].mxu0
        %349 = vdwg.mxu0
        %350 = vst [vmem:[%s232] sm:$0xff] %v345
        %s351 = sand.u32 %s121, 1
        %s352 = scalar_lea.sflag [#allocation4], %s351
        %s353 = sand.u32 %s121, 1
        %s354 = smul.addr %s353, 8
        %s355 = scalar_lea.vmem [#allocation7], %s354
        // Predicated region
        $region41: #{tpu_custom_call.1} parent=31 // pred_check
          %p356 = pneg %p131
        $region42: #{tpu_custom_call.1} parent=31 // pred_check_branch
          %358 = sbr.rel (%p356) target = $region44
        $region43: #{tpu_custom_call.1} parent=31 // pred_region
          %s360 = ssub.s32 128, 128
          %361 = vsyncadd %s352, %s360
          %s362 = sadd.s32 %s25, %s26
          %s363 = smul.addr %s362, 128
          %s364 = scalar_lea.hbm %s3, %s363
          %s366 = sshll.u32 %s355, 4
          %s367 = int_to_ptr.vmem [resolvable:$true] %s366
          %369 = dma.vmem_to_hbm [thread:$0]  %s367, 128, %s364, %s352
        $region44: #{tpu_custom_call.1} parent=31 // pred_fallthru
          _
      $region32: #{tpu_custom_call.1} parent=5 // pred_fallthru
        _
      %p370 = scmp.le.s32.totalorder 2, %s16
      // Predicated region
      $region45: #{tpu_custom_call.1} parent=5 // pred_check
        %p371 = pneg %p370
      $region46: #{tpu_custom_call.1} parent=5 // pred_check_branch
        %373 = sbr.rel (%p371) target = $region48
      $region47: #{tpu_custom_call.1} parent=5 // pred_region
        %s374 = ssub.s32 %s16, 2
        // Predicated region
        $region49: #{tpu_custom_call.1} parent=47 // pred_check
          %p375 = pneg %p137
        $region50: #{tpu_custom_call.1} parent=47 // pred_check_branch
          %377 = sbr.rel (%p375) target = $region52
        $region51: #{tpu_custom_call.1} parent=47 // pred_region
          %s378 = sand.u32 %s122, 1
          %s379 = scalar_lea.sflag [#allocation4], %s378
          %s380 = sand.u32 %s122, 1
          %s381 = smul.addr %s380, 8
          %s382 = scalar_lea.vmem [#allocation7], %s381
          %383 = dma.done %s379, 128
        $region52: #{tpu_custom_call.1} parent=47 // pred_fallthru
          _
      $region48: #{tpu_custom_call.1} parent=5 // pred_fallthru
        _
    $region6: #{tpu_custom_call.1} parent=1 // loop_footer
      %s20 = sadd.s32 1, %s16
    $region7: #{tpu_custom_call.1} parent=1 // loop_footer_branch
      %15 = sbr.rel target = $region3
    $region8: #{tpu_custom_call.1} parent=1 // loop_exit
      _
    %384 = vsyncpa [#allocation3], 1
    %s385 = scalar_lea.sflag [#allocation3], 1
    %386 = vsyncpa %s385, 1
    %387 = vsyncpa [#allocation6], 1
    %388 = vsyncpa [#allocation4], 1
    %s389 = scalar_lea.sflag [#allocation4], 1
    %390 = vsyncpa %s389, 1

</llo_original>
